<compile_context>
chip_gen: v6e
topology: v6e:2x2x1
jax: 0.10.0
libtpu: 0.0.40
codegen_flags: <defaults>
</compile_context>

<pallas_src>
import jax
import jax.numpy as jnp
from jax.experimental import pallas as pl
from jax.experimental.pallas import tpu as pltpu

EPS = 1e-8          # CosineSimilarity eps (torch default)
SCALE = 10000.0     # multiplier in Discriminator.forward


def _softmax_cdist(a):
    """softmax(cdist(a, a), axis=1) for a 2-D [B, F] VMEM block."""
    b = a.shape[0]
    # Gram matrix on the MXU, contracting the feature axis (no transpose).
    gram = jax.lax.dot_general(
        a, a, dimension_numbers=(((1,), (1,)), ((), ())),
        preferred_element_type=jnp.float32)                       # [B, B]
    rows = jax.lax.broadcasted_iota(jnp.int32, (b, b), 0)
    cols = jax.lax.broadcasted_iota(jnp.int32, (b, b), 1)
    diag = jnp.where(rows == cols, gram, 0.0)
    sq_col = jnp.sum(diag, axis=1, keepdims=True)                 # [B, 1] = ||a_i||^2
    sq_row = jnp.sum(diag, axis=0, keepdims=True)                 # [1, B] = ||a_j||^2
    d2 = jnp.maximum(sq_col + sq_row - 2.0 * gram, 0.0)
    dist = jnp.sqrt(d2)                                           # [B, B] pairwise L2
    m = jnp.max(dist, axis=1, keepdims=True)
    e = jnp.exp(dist - m)
    return e / jnp.sum(e, axis=1, keepdims=True)                  # row softmax


def _discriminator_kernel(x_ref, y_ref, o_ref):
    x = x_ref[...].astype(jnp.float32)        # [B, D] embedded_support_x
    y = y_ref[...].astype(jnp.float32)        # [B, C] support_y

    f = _softmax_cdist(x)                     # feature distance, [B, B]
    l = _softmax_cdist(y)                     # label distance,   [B, B]

    # CosineSimilarity(dim=1), batched over rows; keep everything 2-D.
    num = jnp.sum(f * l, axis=1, keepdims=True)                   # [B, 1]
    nf = jnp.sqrt(jnp.sum(f * f, axis=1, keepdims=True))          # [B, 1]
    nl = jnp.sqrt(jnp.sum(l * l, axis=1, keepdims=True))          # [B, 1]
    cos = num / jnp.maximum(nf * nl, jnp.float32(EPS))            # [B, 1]

    # 10000 * || 1 - cos ||_2  (single batched sqrt at the end)
    o_ref[0, 0] = jnp.float32(SCALE) * jnp.sqrt(jnp.sum((1.0 - cos) ** 2))


def discriminator_forward(embedded_support_x, support_y):
    """Returns the scalar Discriminator loss, computed in one Pallas kernel."""
    b, d = embedded_support_x.shape
    _, c = support_y.shape
    itemsize = jnp.dtype(embedded_support_x.dtype).itemsize
    cost = pl.CostEstimate(
        flops=int(2 * b * b * (d + c) + 64 * b * b),
        transcendentals=int(2 * b * b + 8 * b),
        bytes_accessed=int(b * d * itemsize
                           + b * c * jnp.dtype(support_y.dtype).itemsize + 4),
    )
    out = pl.pallas_call(
        _discriminator_kernel,
        out_shape=jax.ShapeDtypeStruct((1, 1), jnp.float32),
        in_specs=[
            pl.BlockSpec(memory_space=pltpu.MemorySpace.VMEM),    # embedded_support_x
            pl.BlockSpec(memory_space=pltpu.MemorySpace.VMEM),    # support_y
        ],
        out_specs=pl.BlockSpec(memory_space=pltpu.MemorySpace.SMEM),
        compiler_params=pltpu.CompilerParams(vmem_limit_bytes=32 * 1024 * 1024),
        cost_estimate=cost,
    )(embedded_support_x, support_y)
    return out[0, 0]


def _reference(x, y):
    """Pure-JAX reference using the broadcast-difference cdist formulation."""
    def sm_cdist(a):
        a = a.astype(jnp.float32)
        d2 = jnp.sum((a[:, None, :] - a[None, :, :]) ** 2, axis=-1)
        return jax.nn.softmax(jnp.sqrt(d2), axis=1)

    f = sm_cdist(x)
    l = sm_cdist(y)
    num = jnp.sum(f * l, axis=1)
    denom = jnp.maximum(jnp.linalg.norm(f, axis=1) * jnp.linalg.norm(l, axis=1),
                        EPS)
    cos = num / denom
    return SCALE * jnp.sqrt(jnp.sum((1.0 - cos) ** 2))


if __name__ == "__main__":
    key = jax.random.PRNGKey(0)
    k1, k2 = jax.random.split(key, 2)

    B, D, C = 8, 32, 4   # batch, embedding dim, num classes (one-hot labels)

    embedded_support_x = jax.random.normal(k1, (B, D), dtype=jnp.float32)
    labels = jax.random.randint(k2, (B,), 0, C)
    support_y = jax.nn.one_hot(labels, C, dtype=jnp.float32)

    out = discriminator_forward(embedded_support_x, support_y)
    out = jax.block_until_ready(out)

    ref = _reference(embedded_support_x, support_y)
    assert jnp.allclose(out, ref, rtol=1e-3, atol=1e-2), (out, ref)

    print("KERNEL_OK")
</pallas_src>

<mosaic_0001>
module attributes {stable_mosaic.version = 11 : i64} {
  func.func @_discriminator_kernel(%arg0: memref<8x32xf32, #tpu.memory_space<vmem>>, %arg1: memref<8x4xf32, #tpu.memory_space<vmem>>, %arg2: memref<1x1xf32, #tpu.memory_space<smem>>) attributes {dimension_semantics = [], scalar_prefetch = 0 : i64, scratch_operands = 0 : i64, tpu.core_type = #tpu.core_type<tc>} {
    %c0 = arith.constant 0 : index
    %c0_0 = arith.constant 0 : index
    %0 = vector.load %arg0[%c0, %c0_0] : memref<8x32xf32, #tpu.memory_space<vmem>>, vector<8x32xf32>
    %c0_1 = arith.constant 0 : index
    %c0_2 = arith.constant 0 : index
    %1 = vector.load %arg1[%c0_1, %c0_2] : memref<8x4xf32, #tpu.memory_space<vmem>>, vector<8x4xf32>
    %cst = arith.constant dense<0.000000e+00> : vector<8x8xf32>
    %2 = tpu.matmul %0, %0, %cst {dimension_numbers = #tpu.dot_dimension_numbers<[1], [1], [0], [0], [0, 0, 1, 0], [], []>} : vector<8x32xf32>, vector<8x32xf32>, vector<8x8xf32> -> vector<8x8xf32>
    %3 = tpu.iota {dimensions = array<i32: 0>} : vector<8x8xi32>
    %4 = tpu.iota {dimensions = array<i32: 1>} : vector<8x8xi32>
    %5 = arith.cmpi eq, %3, %4 : vector<8x8xi32>
    %cst_3 = arith.constant 0.000000e+00 : f32
    %6 = vector.broadcast %cst_3 : f32 to vector<8x8xf32>
    %7 = arith.select %5, %2, %6 : vector<8x8xi1>, vector<8x8xf32>
    %cst_4 = arith.constant dense<0.000000e+00> : vector<8xf32>
    %8 = vector.multi_reduction <add>, %7, %cst_4 [1] : vector<8x8xf32> to vector<8xf32>
    %9 = vector.shape_cast %8 : vector<8xf32> to vector<8x1xf32>
    %cst_5 = arith.constant dense<0.000000e+00> : vector<8xf32>
    %10 = vector.multi_reduction <add>, %7, %cst_5 [0] : vector<8x8xf32> to vector<8xf32>
    %11 = vector.shape_cast %10 : vector<8xf32> to vector<1x8xf32>
    %12 = vector.broadcast %9 : vector<8x1xf32> to vector<8x8xf32>
    %13 = vector.broadcast %11 : vector<1x8xf32> to vector<8x8xf32>
    %14 = arith.addf %12, %13 : vector<8x8xf32>
    %cst_6 = arith.constant 2.000000e+00 : f32
    %15 = vector.broadcast %cst_6 : f32 to vector<8x8xf32>
    %16 = arith.mulf %15, %2 : vector<8x8xf32>
    %17 = arith.subf %14, %16 : vector<8x8xf32>
    %cst_7 = arith.constant 0.000000e+00 : f32
    %18 = vector.broadcast %cst_7 : f32 to vector<8x8xf32>
    %19 = arith.maximumf %17, %18 : vector<8x8xf32>
    %20 = math.sqrt %19 : vector<8x8xf32>
    %cst_8 = arith.constant dense<0xFF800000> : vector<8xf32>
    %21 = vector.multi_reduction <maximumf>, %20, %cst_8 [1] : vector<8x8xf32> to vector<8xf32>
    %22 = vector.shape_cast %21 : vector<8xf32> to vector<8x1xf32>
    %23 = vector.broadcast %22 : vector<8x1xf32> to vector<8x8xf32>
    %24 = arith.subf %20, %23 : vector<8x8xf32>
    %25 = math.exp %24 : vector<8x8xf32>
    %cst_9 = arith.constant dense<0.000000e+00> : vector<8xf32>
    %26 = vector.multi_reduction <add>, %25, %cst_9 [1] : vector<8x8xf32> to vector<8xf32>
    %27 = vector.shape_cast %26 : vector<8xf32> to vector<8x1xf32>
    %28 = vector.broadcast %27 : vector<8x1xf32> to vector<8x8xf32>
    %29 = arith.divf %25, %28 : vector<8x8xf32>
    %cst_10 = arith.constant dense<0.000000e+00> : vector<8x8xf32>
    %30 = tpu.matmul %1, %1, %cst_10 {dimension_numbers = #tpu.dot_dimension_numbers<[1], [1], [0], [0], [0, 0, 1, 0], [], []>} : vector<8x4xf32>, vector<8x4xf32>, vector<8x8xf32> -> vector<8x8xf32>
    %31 = tpu.iota {dimensions = array<i32: 0>} : vector<8x8xi32>
    %32 = tpu.iota {dimensions = array<i32: 1>} : vector<8x8xi32>
    %33 = arith.cmpi eq, %31, %32 : vector<8x8xi32>
    %cst_11 = arith.constant 0.000000e+00 : f32
    %34 = vector.broadcast %cst_11 : f32 to vector<8x8xf32>
    %35 = arith.select %33, %30, %34 : vector<8x8xi1>, vector<8x8xf32>
    %cst_12 = arith.constant dense<0.000000e+00> : vector<8xf32>
    %36 = vector.multi_reduction <add>, %35, %cst_12 [1] : vector<8x8xf32> to vector<8xf32>
    %37 = vector.shape_cast %36 : vector<8xf32> to vector<8x1xf32>
    %cst_13 = arith.constant dense<0.000000e+00> : vector<8xf32>
    %38 = vector.multi_reduction <add>, %35, %cst_13 [0] : vector<8x8xf32> to vector<8xf32>
    %39 = vector.shape_cast %38 : vector<8xf32> to vector<1x8xf32>
    %40 = vector.broadcast %37 : vector<8x1xf32> to vector<8x8xf32>
    %41 = vector.broadcast %39 : vector<1x8xf32> to vector<8x8xf32>
    %42 = arith.addf %40, %41 : vector<8x8xf32>
    %cst_14 = arith.constant 2.000000e+00 : f32
    %43 = vector.broadcast %cst_14 : f32 to vector<8x8xf32>
    %44 = arith.mulf %43, %30 : vector<8x8xf32>
    %45 = arith.subf %42, %44 : vector<8x8xf32>
    %cst_15 = arith.constant 0.000000e+00 : f32
    %46 = vector.broadcast %cst_15 : f32 to vector<8x8xf32>
    %47 = arith.maximumf %45, %46 : vector<8x8xf32>
    %48 = math.sqrt %47 : vector<8x8xf32>
    %cst_16 = arith.constant dense<0xFF800000> : vector<8xf32>
    %49 = vector.multi_reduction <maximumf>, %48, %cst_16 [1] : vector<8x8xf32> to vector<8xf32>
    %50 = vector.shape_cast %49 : vector<8xf32> to vector<8x1xf32>
    %51 = vector.broadcast %50 : vector<8x1xf32> to vector<8x8xf32>
    %52 = arith.subf %48, %51 : vector<8x8xf32>
    %53 = math.exp %52 : vector<8x8xf32>
    %cst_17 = arith.constant dense<0.000000e+00> : vector<8xf32>
    %54 = vector.multi_reduction <add>, %53, %cst_17 [1] : vector<8x8xf32> to vector<8xf32>
    %55 = vector.shape_cast %54 : vector<8xf32> to vector<8x1xf32>
    %56 = vector.broadcast %55 : vector<8x1xf32> to vector<8x8xf32>
    %57 = arith.divf %53, %56 : vector<8x8xf32>
    %58 = arith.mulf %29, %57 : vector<8x8xf32>
    %cst_18 = arith.constant dense<0.000000e+00> : vector<8xf32>
    %59 = vector.multi_reduction <add>, %58, %cst_18 [1] : vector<8x8xf32> to vector<8xf32>
    %60 = vector.shape_cast %59 : vector<8xf32> to vector<8x1xf32>
    %61 = arith.mulf %29, %29 : vector<8x8xf32>
    %cst_19 = arith.constant dense<0.000000e+00> : vector<8xf32>
    %62 = vector.multi_reduction <add>, %61, %cst_19 [1] : vector<8x8xf32> to vector<8xf32>
    %63 = vector.shape_cast %62 : vector<8xf32> to vector<8x1xf32>
    %64 = math.sqrt %63 : vector<8x1xf32>
    %65 = arith.mulf %57, %57 : vector<8x8xf32>
    %cst_20 = arith.constant dense<0.000000e+00> : vector<8xf32>
    %66 = vector.multi_reduction <add>, %65, %cst_20 [1] : vector<8x8xf32> to vector<8xf32>
    %67 = vector.shape_cast %66 : vector<8xf32> to vector<8x1xf32>
    %68 = math.sqrt %67 : vector<8x1xf32>
    %69 = arith.mulf %64, %68 : vector<8x1xf32>
    %cst_21 = arith.constant 9.99999993E-9 : f32
    %70 = vector.broadcast %cst_21 : f32 to vector<8x1xf32>
    %71 = arith.maximumf %69, %70 : vector<8x1xf32>
    %72 = arith.divf %60, %71 : vector<8x1xf32>
    %cst_22 = arith.constant 1.000000e+00 : f32
    %73 = vector.broadcast %cst_22 : f32 to vector<8x1xf32>
    %74 = arith.subf %73, %72 : vector<8x1xf32>
    %75 = arith.mulf %74, %74 : vector<8x1xf32>
    %76 = vector.shape_cast %75 : vector<8x1xf32> to vector<1x8x1xf32>
    %cst_23 = arith.constant dense<0.000000e+00> : vector<1xf32>
    %77 = vector.multi_reduction <add>, %76, %cst_23 [1, 2] : vector<1x8x1xf32> to vector<1xf32>
    %78 = vector.shape_cast %77 : vector<1xf32> to vector<1x1x1xf32>
    %79 = vector.extract %78[0, 0, 0] : f32 from vector<1x1x1xf32>
    %80 = math.sqrt %79 : f32
    %cst_24 = arith.constant 1.000000e+04 : f32
    %81 = arith.mulf %cst_24, %80 : f32
    %c0_25 = arith.constant 0 : index
    %c0_26 = arith.constant 0 : index
    %82 = memref.load %arg2[%c0_25, %c0_26] : memref<1x1xf32, #tpu.memory_space<smem>>
    memref.store %81, %arg2[%c0_25, %c0_26] : memref<1x1xf32, #tpu.memory_space<smem>>
    return
  }
}

</mosaic_0001>

<llo_original>
// kernel: tpu_custom_call.1
$region0: #{tpu_custom_call.1}
  #allocation0 [shape = 'u32[]', space=smem, size = 0x4, offset = 0x4, fixed_abs, tag = 'smem constant byte address 0x4 - core index']
  #allocation1 [shape = 'u32[144,128]{1,0:T(1,128)}', space=vmem, size = 0x12000, scoped, tag = 'internal scratch']
  %s0 = inlined_call_operand.vmem [shape: f32[8,32], index: 0, kind: input, shape index: {}]
  %s1 = inlined_call_operand.vmem [shape: f32[8,4], index: 1, kind: input, shape index: {}]
  %s2 = inlined_call_operand.hbm [shape: f32[1,1], index: 2, kind: output, shape index: {}]
  %s3 = sld [smem:[#allocation0]]
  $region18: #{tpu_custom_call.1} parent=0
    _
  %s5 = ssub.s32 1, %s3
  %s6 = scalar_select 0, %s5, %s3
  $region1: #{tpu_custom_call.1} parent=0
    #allocation2 [shape = 'u8[512]{0}', space=smem, size = 0x200, scoped, tag = 'output window, operand 0, single buffered']
    #allocation3 [shape = 's32[1]{0}', space=sflag, size = 0x4, scoped, tag = 'scoped memory for tpu_custom_call.1']
    %7 = vsyncpa [#allocation3], 0
    // Predicated region
    $region2: #{tpu_custom_call.1} parent=1 // pred_check
      _
    $region3: #{tpu_custom_call.1} parent=1 // pred_check_branch
      %9 = sbr.rel (0) target = $region5
    $region4: #{tpu_custom_call.1} parent=1 // pred_region
      _
    $region5: #{tpu_custom_call.1} parent=1 // pred_fallthru
      _
    // Predicated region
    $region6: #{tpu_custom_call.1} parent=1 // pred_check
      _
    $region7: #{tpu_custom_call.1} parent=1 // pred_check_branch
      %11 = sbr.rel (0) target = $region9
    $region8: #{tpu_custom_call.1} parent=1 // pred_region
      _
    $region9: #{tpu_custom_call.1} parent=1 // pred_fallthru
      _
    %v12 = vld [vmem:[%s0] sm:$0xff]
    %v13 = vld [vmem:[%s1] sm:$0xff]
    %vm14 = vcmask 261120
    %v16 = vsel %vm14, %v12, 0
    %18 = vmatprep.subr.mxu0 0.0
    %19 = vmatpush1.xpose.msra.mxu0 0.0
    %20 = vmatprep.subr.mxu0 0.0
    %21 = vmatpush1.xpose.msra.mxu0 0.0
    %22 = vmatprep.subr.mxu0 0.0
    %23 = vmatpush1.xpose.msra.mxu0 0.0
    %24 = vmatprep.subr.mxu0 0.0
    %25 = vmatpush1.xpose.msra.mxu0 0.0
    %26 = vmatprep.subr.mxu0 0.0
    %27 = vmatpush1.xpose.msra.mxu0 0.0
    %28 = vmatprep.subr.mxu0 0.0
    %29 = vmatpush1.xpose.msra.mxu0 0.0
    %30 = vmatprep.subr.mxu0 0.0
    %31 = vmatpush1.xpose.msra.mxu0 0.0
    %32 = vmatprep.subr.mxu0 0.0
    %33 = vmatpush1.xpose.msra.mxu0 0.0
    %34 = vmatprep.subr.mxu0 0.0
    %35 = vmatpush1.xpose.msra.mxu0 0.0
    %36 = vmatprep.subr.mxu0 0.0
    %37 = vmatpush1.xpose.msra.mxu0 0.0
    %38 = vmatprep.subr.mxu0 0.0
    %39 = vmatpush1.xpose.msra.mxu0 0.0
    %40 = vmatprep.subr.mxu0 0.0
    %41 = vmatpush1.xpose.msra.mxu0 0.0
    %42 = vmatprep.subr.mxu0 0.0
    %43 = vmatpush1.xpose.msra.mxu0 0.0
    %44 = vmatprep.subr.mxu0 0.0
    %45 = vmatpush1.xpose.msra.mxu0 0.0
    %46 = vmatprep.subr.mxu0 0.0
    %47 = vmatpush1.xpose.msra.mxu0 0.0
    %48 = vmatprep.subr.mxu0 0.0
    %49 = vmatpush1.xpose.msra.mxu0 %v16
    %50 = vmatprep.subr.mxu0 0.0
    %51 = vmatpush2.xpose.msra.mxu0 0.0
    %52 = vmatprep.subr.mxu0 0.0
    %53 = vmatpush2.xpose.msra.mxu0 0.0
    %54 = vmatprep.subr.mxu0 0.0
    %55 = vmatpush2.xpose.msra.mxu0 0.0
    %56 = vmatprep.subr.mxu0 0.0
    %57 = vmatpush2.xpose.msra.mxu0 0.0
    %58 = vmatprep.subr.mxu0 0.0
    %59 = vmatpush2.xpose.msra.mxu0 0.0
    %60 = vmatprep.subr.mxu0 0.0
    %61 = vmatpush2.xpose.msra.mxu0 0.0
    %62 = vmatprep.subr.mxu0 0.0
    %63 = vmatpush2.xpose.msra.mxu0 0.0
    %64 = vmatprep.subr.mxu0 0.0
    %65 = vmatpush2.xpose.msra.mxu0 0.0
    %66 = vmatprep.subr.mxu0 0.0
    %67 = vmatpush2.xpose.msra.mxu0 0.0
    %68 = vmatprep.subr.mxu0 0.0
    %69 = vmatpush2.xpose.msra.mxu0 0.0
    %70 = vmatprep.subr.mxu0 0.0
    %71 = vmatpush2.xpose.msra.mxu0 0.0
    %72 = vmatprep.subr.mxu0 0.0
    %73 = vmatpush2.xpose.msra.mxu0 0.0
    %74 = vmatprep.subr.mxu0 0.0
    %75 = vmatpush2.xpose.msra.mxu0 0.0
    %76 = vmatprep.subr.mxu0 0.0
    %77 = vmatpush2.xpose.msra.mxu0 0.0
    %78 = vmatprep.subr.mxu0 0.0
    %79 = vmatpush2.xpose.msra.mxu0 0.0
    %80 = vmatprep.subr.mxu0 0.0
    %81 = vmatpush2.xpose.msra.mxu0 0.0
    %82 = vmatprep.mubr.f32.mxu0 0.0
    %83 = vmatmul.mubr.f32.gmra.mxu0 %v16
    %v84 = vpop.f32.mrf.mxu0
    %v85 = vadd.f32 0.0, %v84
    %v86 = vpop.f32.mrf.mxu0
    %87 = vdwg.mxu0
    %v88 = vlaneseq
    %v89 = vshrl.u32 %v88, 7
    %v90 = vlaneseq
    %v91 = vand.u32 %v90, 127
    %vm92 = vcmp.eq.s32.totalorder %v89, %v91
    %v93 = vsel %vm92, %v85, 0.0
    %vm94 = vcmask 64512
    %v95 = vsel %vm94, %v93, 0.0
    %96 = vadd.xlane.f32.xlu0 %v95
    %v97 = vpop.xlane.xlu0 %96
    %v98 = vrot.slane %v95, 4
    %v99 = vadd.f32 %v95, %v98
    %v100 = vrot.slane %v99, 2
    %v101 = vadd.f32 %v99, %v100
    %v102 = vrot.slane %v101, 1
    %v103 = vadd.f32 %v101, %v102
    %v104 = vadd.f32 %v97, %v103
    %v105 = vmul.f32 %v85, 2.0
    %v106 = vsub.f32 %v104, %v105
    %v107 = vmax.f32 %v106, 0.0
    %v108 = vrsqrt.pop %v107
    %v109 = vmul.f32 %v107, %v108
    %vm110 = vcmp.eq.f32.partialorder %v107, inf
    %v111 = vsel %vm110, %v107, %v109
    %vm112 = vcmp.eq.f32.partialorder %v107, 0.0
    %v113 = vand.u32 %v107, 2147483648
    %v114 = vsel %vm112, %v113, %v111
    %v115 = vsel %vm94, %v114, -inf
    %116 = vmax.xlane.f32.xlu0 %v115
    %v117 = vpop.xlane.xlu0 %116
    %v118 = vsub.f32 %v114, %v117
    %v119 = vmul.f32 %v118, 1.442695
    %v120 = vpow.pop %v119
    %v121 = vsel %vm94, %v120, 0.0
    %122 = vadd.xlane.f32.xlu0 %v121
    %v123 = vpop.xlane.xlu0 %122
    %v124 = vrcp.pop %v123
    %v125 = vmul.f32 %v120, %v124
    %vm126 = vcmask 31744
    %v128 = vsel %vm126, %v13, 0
    %130 = vmatprep.subr.mxu0 0.0
    %131 = vmatpush1.xpose.msra.mxu0 0.0
    %132 = vmatprep.subr.mxu0 0.0
    %133 = vmatpush1.xpose.msra.mxu0 0.0
    %134 = vmatprep.subr.mxu0 0.0
    %135 = vmatpush1.xpose.msra.mxu0 0.0
    %136 = vmatprep.subr.mxu0 0.0
    %137 = vmatpush1.xpose.msra.mxu0 0.0
    %138 = vmatprep.subr.mxu0 0.0
    %139 = vmatpush1.xpose.msra.mxu0 0.0
    %140 = vmatprep.subr.mxu0 0.0
    %141 = vmatpush1.xpose.msra.mxu0 0.0
    %142 = vmatprep.subr.mxu0 0.0
    %143 = vmatpush1.xpose.msra.mxu0 0.0
    %144 = vmatprep.subr.mxu0 0.0
    %145 = vmatpush1.xpose.msra.mxu0 0.0
    %146 = vmatprep.subr.mxu0 0.0
    %147 = vmatpush1.xpose.msra.mxu0 0.0
    %148 = vmatprep.subr.mxu0 0.0
    %149 = vmatpush1.xpose.msra.mxu0 0.0
    %150 = vmatprep.subr.mxu0 0.0
    %151 = vmatpush1.xpose.msra.mxu0 0.0
    %152 = vmatprep.subr.mxu0 0.0
    %153 = vmatpush1.xpose.msra.mxu0 0.0
    %154 = vmatprep.subr.mxu0 0.0
    %155 = vmatpush1.xpose.msra.mxu0 0.0
    %156 = vmatprep.subr.mxu0 0.0
    %157 = vmatpush1.xpose.msra.mxu0 0.0
    %158 = vmatprep.subr.mxu0 0.0
    %159 = vmatpush1.xpose.msra.mxu0 0.0
    %160 = vmatprep.subr.mxu0 0.0
    %161 = vmatpush1.xpose.msra.mxu0 %v128
    %162 = vmatprep.subr.mxu0 0.0
    %163 = vmatpush2.xpose.msra.mxu0 0.0
    %164 = vmatprep.subr.mxu0 0.0
    %165 = vmatpush2.xpose.msra.mxu0 0.0
    %166 = vmatprep.subr.mxu0 0.0
    %167 = vmatpush2.xpose.msra.mxu0 0.0
    %168 = vmatprep.subr.mxu0 0.0
    %169 = vmatpush2.xpose.msra.mxu0 0.0
    %170 = vmatprep.subr.mxu0 0.0
    %171 = vmatpush2.xpose.msra.mxu0 0.0
    %172 = vmatprep.subr.mxu0 0.0
    %173 = vmatpush2.xpose.msra.mxu0 0.0
    %174 = vmatprep.subr.mxu0 0.0
    %175 = vmatpush2.xpose.msra.mxu0 0.0
    %176 = vmatprep.subr.mxu0 0.0
    %177 = vmatpush2.xpose.msra.mxu0 0.0
    %178 = vmatprep.subr.mxu0 0.0
    %179 = vmatpush2.xpose.msra.mxu0 0.0
    %180 = vmatprep.subr.mxu0 0.0
    %181 = vmatpush2.xpose.msra.mxu0 0.0
    %182 = vmatprep.subr.mxu0 0.0
    %183 = vmatpush2.xpose.msra.mxu0 0.0
    %184 = vmatprep.subr.mxu0 0.0
    %185 = vmatpush2.xpose.msra.mxu0 0.0
    %186 = vmatprep.subr.mxu0 0.0
    %187 = vmatpush2.xpose.msra.mxu0 0.0
    %188 = vmatprep.subr.mxu0 0.0
    %189 = vmatpush2.xpose.msra.mxu0 0.0
    %190 = vmatprep.subr.mxu0 0.0
    %191 = vmatpush2.xpose.msra.mxu0 0.0
    %192 = vmatprep.subr.mxu0 0.0
    %193 = vmatpush2.xpose.msra.mxu0 0.0
    %194 = vmatprep.mubr.f32.mxu0 0.0
    %195 = vmatmul.mubr.f32.gmra.mxu0 %v128
    %v196 = vpop.f32.mrf.mxu0
    %v197 = vadd.f32 0.0, %v196
    %v198 = vpop.f32.mrf.mxu0
    %199 = vdwg.mxu0
    %v200 = vsel %vm92, %v197, 0.0
    %v201 = vsel %vm94, %v200, 0.0
    %202 = vadd.xlane.f32.xlu0 %v201
    %v203 = vpop.xlane.xlu0 %202
    %v204 = vrot.slane %v201, 4
    %v205 = vadd.f32 %v201, %v204
    %v206 = vrot.slane %v205, 2
    %v207 = vadd.f32 %v205, %v206
    %v208 = vrot.slane %v207, 1
    %v209 = vadd.f32 %v207, %v208
    %v210 = vadd.f32 %v203, %v209
    %v211 = vmul.f32 %v197, 2.0
    %v212 = vsub.f32 %v210, %v211
    %v213 = vmax.f32 %v212, 0.0
    %v214 = vrsqrt.pop %v213
    %v215 = vmul.f32 %v213, %v214
    %vm216 = vcmp.eq.f32.partialorder %v213, inf
    %v217 = vsel %vm216, %v213, %v215
    %vm218 = vcmp.eq.f32.partialorder %v213, 0.0
    %v219 = vand.u32 %v213, 2147483648
    %v220 = vsel %vm218, %v219, %v217
    %v221 = vsel %vm94, %v220, -inf
    %222 = vmax.xlane.f32.xlu0 %v221
    %v223 = vpop.xlane.xlu0 %222
    %v224 = vsub.f32 %v220, %v223
    %v225 = vmul.f32 %v224, 1.442695
    %v226 = vpow.pop %v225
    %v227 = vsel %vm94, %v226, 0.0
    %228 = vadd.xlane.f32.xlu0 %v227
    %v229 = vpop.xlane.xlu0 %228
    %v230 = vrcp.pop %v229
    %v231 = vmul.f32 %v226, %v230
    %v232 = vmul.f32 %v125, %v231
    %v233 = vsel %vm94, %v232, 0.0
    %234 = vadd.xlane.f32.xlu0 %v233
    %v235 = vpop.xlane.xlu0 %234
    %v236 = vmul.f32 %v125, %v125
    %v237 = vsel %vm94, %v236, 0.0
    %238 = vadd.xlane.f32.xlu0 %v237
    %v239 = vpop.xlane.xlu0 %238
    %v240 = vrsqrt.pop %v239
    %v241 = vmul.f32 %v239, %v240
    %vm242 = vcmp.eq.f32.partialorder %v239, inf
    %v243 = vsel %vm242, %v239, %v241
    %vm244 = vcmp.eq.f32.partialorder %v239, 0.0
    %v245 = vand.u32 %v239, 2147483648
    %v246 = vsel %vm244, %v245, %v243
    %v247 = vmul.f32 %v231, %v231
    %v248 = vsel %vm94, %v247, 0.0
    %249 = vadd.xlane.f32.xlu0 %v248
    %v250 = vpop.xlane.xlu0 %249
    %v251 = vrsqrt.pop %v250
    %v252 = vmul.f32 %v250, %v251
    %vm253 = vcmp.eq.f32.partialorder %v250, inf
    %v254 = vsel %vm253, %v250, %v252
    %vm255 = vcmp.eq.f32.partialorder %v250, 0.0
    %v256 = vand.u32 %v250, 2147483648
    %v257 = vsel %vm255, %v256, %v254
    %v258 = vmul.f32 %v246, %v257
    %v259 = vmax.f32 %v258, 1e-08
    %v260 = vrcp.pop %v259
    %v261 = vmul.f32 %v235, %v260
    %v262 = vsub.f32 1.0, %v261
    %v263 = vmul.f32 %v262, %v262
    %vm264 = vcmask 7168
    %v265 = vsel %vm264, %v263, 0.0
    %266 = vadd.xlane.f32.xlu0 %v265
    %v267 = vpop.xlane.xlu0 %266
    %v268 = vrot.slane %v267, 4
    %v269 = vadd.f32 %v267, %v268
    %v270 = vrot.slane %v269, 2
    %v271 = vadd.f32 %v269, %v270
    %v272 = vrot.slane %v271, 1
    %v273 = vadd.f32 %v271, %v272
    %s274 = vtos %v273
    %v275 = vstv %s274
    %v276 = vrsqrt.pop %v275
    %v277 = vmul.f32 %v275, %v276
    %vm278 = vcmp.eq.f32.partialorder %v275, inf
    %v279 = vsel %vm278, %v275, %v277
    %vm280 = vcmp.eq.f32.partialorder %v275, 0.0
    %v281 = vand.u32 %v275, 2147483648
    %v282 = vsel %vm280, %v281, %v279
    %s283 = vtos %v282
    %s284 = smul.f32 %s283, 10000.0
    %s285 = scalar_lea.smem [#allocation2], 0
    %286 = sst [smem:[%s285]] %s284
    // Predicated region
    $region10: #{tpu_custom_call.1} parent=1 // pred_check
      _
    $region11: #{tpu_custom_call.1} parent=1 // pred_check_branch
      %288 = sbr.rel (0) target = $region13
    $region12: #{tpu_custom_call.1} parent=1 // pred_region
      %s290 = ssub.s32 16, 16
      %291 = vsyncadd [#allocation3], %s290
      %294 = dma.smem_to_hbm [#allocation2], 16, %s2, [#allocation3]
    $region13: #{tpu_custom_call.1} parent=1 // pred_fallthru
      _
    // Predicated region
    $region14: #{tpu_custom_call.1} parent=1 // pred_check
      _
    $region15: #{tpu_custom_call.1} parent=1 // pred_check_branch
      %296 = sbr.rel (0) target = $region17
    $region16: #{tpu_custom_call.1} parent=1 // pred_region
      %297 = dma.done [#allocation3], 16
    $region17: #{tpu_custom_call.1} parent=1 // pred_fallthru
      _
    %298 = sfence
    %299 = vsyncpa [#allocation3], 1

</llo_original>
